<compile_context>
chip_gen: v5e
topology: v5e:2x2
jax: 0.10.0
libtpu: 0.0.40
codegen_flags: <defaults>
</compile_context>

<pallas_src>
import functools

import jax
import jax.numpy as jnp
from jax.experimental import pallas as pl
from jax.experimental.pallas import tpu as pltpu


# ---------------------------------------------------------------------------
# Kernel: channel LayerNorm on a (bN, C, TILE_HW) tile (C in sublanes, HW in lanes)
# ---------------------------------------------------------------------------
def _prenorm_kernel(x_ref, g_ref, o_ref, *, eps, inv_c):
    # Compute in f32 regardless of storage dtype (v5e VPU has no bf16 math).
    x = x_ref[...].astype(jnp.float32)                       # (bN, C, T)
    g = g_ref[...].astype(jnp.float32)                       # (1,  C, 1)
    # One-pass moments: the two sublane reductions overlap on the XLU while the
    # VPU produces x*x; removes the mean -> (x-mean) -> square serial chain.
    s1 = jnp.sum(x, axis=1, keepdims=True)                   # (bN, 1, T)
    s2 = jnp.sum(x * x, axis=1, keepdims=True)                # (bN, 1, T)
    mean = s1 * inv_c
    var = jnp.maximum(s2 * inv_c - mean * mean, 0.0)          # biased var, clamp fp error
    y = (x - mean) * jax.lax.rsqrt(var + eps) * g
    o_ref[...] = y.astype(o_ref.dtype)


# ---------------------------------------------------------------------------
# Block-size picker: byte-budget aware (C, dtype), lane-aligned, megacore friendly
# ---------------------------------------------------------------------------
def _pick_blocks(N, C, HW, dtype_bytes, target_block_bytes=2 << 20):
    hw_pad = pl.cdiv(HW, 128) * 128                     # lanes, rounded up to 128
    col_bytes = C * dtype_bytes                         # bytes per lane column per batch
    max_lanes = max(128, ((target_block_bytes // col_bytes) // 128) * 128)
    tile_hw = min(hw_pad, max_lanes)

    # If one (1, C, tile) step is still small (tiny C), block several batch elements.
    bN = 1
    block_bytes = col_bytes * tile_hw
    if tile_hw >= hw_pad and block_bytes < target_block_bytes and N > 1:
        bN = min(N, max(1, target_block_bytes // block_bytes))
        while N % bN != 0:
            bN -= 1

    # v7x megacore: keep >= 2 grid steps when possible so both TensorCores get work.
    if pl.cdiv(N, bN) * pl.cdiv(HW, tile_hw) < 2:
        if bN > 1:
            bN2 = bN // 2
            while bN2 > 1 and N % bN2 != 0:
                bN2 -= 1
            bN = max(1, bN2)
        elif tile_hw > 128 and HW > 128:
            tile_hw = max(128, ((tile_hw // 2) // 128) * 128)
    return bN, tile_hw


# ---------------------------------------------------------------------------
# Wrapper: NCHW in / NCHW out (reshape is a free view, no transposes)
# ---------------------------------------------------------------------------
def prenorm_forward(x_nchw, g, *, fn=None, tile_hw=None, block_n=None):
    N, C, H, W = x_nchw.shape
    HW = H * W
    in_dtype = x_nchw.dtype
    # eps selection mirrors the PyTorch module (on the tensor's own dtype).
    eps = 1e-5 if in_dtype == jnp.float32 else 1e-3
    dtype_bytes = jnp.dtype(in_dtype).itemsize

    x = x_nchw.reshape(N, C, HW)               # HW lands on the lane (last) dim
    g3 = g.reshape(1, C, 1)

    bN, thw = _pick_blocks(N, C, HW, dtype_bytes)
    if tile_hw is not None:
        thw = tile_hw
    if block_n is not None:
        bN = block_n
    grid = (pl.cdiv(N, bN), pl.cdiv(HW, thw))

    # 2 double-buffered input blocks + 2 output blocks (in storage dtype) plus
    # f32 compute temporaries; keep well under v7x's 64 MiB physical VMEM.
    block_bytes = bN * C * thw * dtype_bytes
    f32_block = bN * C * thw * 4
    vmem_limit = int(min(40 << 20,
                         max(16 << 20, 4 * block_bytes + 2 * f32_block + (2 << 20))))

    out = pl.pallas_call(
        functools.partial(_prenorm_kernel, eps=eps, inv_c=1.0 / C),
        out_shape=jax.ShapeDtypeStruct((N, C, HW), in_dtype),
        grid_spec=pltpu.PrefetchScalarGridSpec(
            num_scalar_prefetch=0,
            grid=grid,
            in_specs=[
                pl.BlockSpec((bN, C, thw), lambda n, s: (n, 0, s)),
                pl.BlockSpec((1, C, 1), lambda n, s: (0, 0, 0)),   # per-channel gain
            ],
            out_specs=pl.BlockSpec((bN, C, thw), lambda n, s: (n, 0, s)),
        ),
        compiler_params=pltpu.CompilerParams(
            dimension_semantics=("parallel", "parallel"),
            vmem_limit_bytes=vmem_limit,
        ),
    )(x, g3)

    y = out.reshape(N, C, H, W)
    # TODO(synk): PreNorm wraps an arbitrary `fn` module chosen at construction time;
    # it is applied here as a plain callable (identity when not supplied).
    return fn(y) if fn is not None else y


# ---------------------------------------------------------------------------
# Pure-JAX reference of the PyTorch semantics
# ---------------------------------------------------------------------------
def _reference(x, g, eps):
    xf = x.astype(jnp.float32)
    mean = jnp.mean(xf, axis=1, keepdims=True)
    var = jnp.mean((xf - mean) ** 2, axis=1, keepdims=True)      # biased, like torch
    return (xf - mean) * jax.lax.rsqrt(var + eps) * g.astype(jnp.float32)


if __name__ == "__main__":
    key = jax.random.PRNGKey(0)
    kx, kg, kx2 = jax.random.split(key, 3)

    # --- primary test: f32, NCHW, HW multiple of 128 ------------------------
    N, C, H, W = 2, 4, 16, 16
    x = jax.random.normal(kx, (N, C, H, W), jnp.float32)
    g = 1.0 + 0.1 * jax.random.normal(kg, (1, C, 1, 1), jnp.float32)

    out = prenorm_forward(x, g)
    jax.block_until_ready(out)
    assert out.shape == (N, C, H, W) and out.dtype == jnp.float32
    ref = _reference(x, g, 1e-5)
    assert jnp.allclose(out, ref, atol=1e-5, rtol=1e-5)

    # --- bf16 path: in-kernel cast, eps=1e-3, halved HBM traffic -------------
    xb = x.astype(jnp.bfloat16)
    out_b = prenorm_forward(xb, g.astype(jnp.bfloat16))
    jax.block_until_ready(out_b)
    assert out_b.shape == (N, C, H, W) and out_b.dtype == jnp.bfloat16
    ref_b = _reference(xb, g.astype(jnp.bfloat16), 1e-3)
    assert jnp.allclose(out_b.astype(jnp.float32), ref_b, atol=5e-2, rtol=5e-2)

    # --- non-128-multiple H*W: partial-block (masked) lane tiles -------------
    H2, W2 = 10, 10
    x2 = jax.random.normal(kx2, (N, C, H2, W2), jnp.float32)
    out2 = prenorm_forward(x2, g)
    jax.block_until_ready(out2)
    ref2 = _reference(x2, g, 1e-5)
    assert out2.shape == (N, C, H2, W2)
    assert jnp.allclose(out2, ref2, atol=1e-5, rtol=1e-5)

    print("KERNEL_OK")
</pallas_src>

<mosaic_0001>
module attributes {stable_mosaic.version = 11 : i64} {
  func.func @_prenorm_kernel(%arg0: i32, %arg1: i32, %arg2: memref<1x4x256xf32, #tpu.memory_space<vmem>>, %arg3: memref<1x4x1xf32, #tpu.memory_space<vmem>>, %arg4: memref<1x4x256xf32, #tpu.memory_space<vmem>>) attributes {dimension_semantics = [#tpu.dimension_semantics<parallel>, #tpu.dimension_semantics<parallel>], iteration_bounds = array<i64: 2, 1>, scalar_prefetch = 0 : i64, scratch_operands = 0 : i64, tpu.core_type = #tpu.core_type<tc>, window_params = [{transform_indices = @transform_0, window_bounds = array<i64: 1, 4, 256>}, {pipeline_mode = #tpu.pipeline_mode<synchronous>, transform_indices = @transform_1, window_bounds = array<i64: 1, 4, 1>}, {transform_indices = @transform_2, window_bounds = array<i64: 1, 4, 256>}]} {
    %c0 = arith.constant 0 : index
    %c0_0 = arith.constant 0 : index
    %c0_1 = arith.constant 0 : index
    %0 = vector.load %arg2[%c0, %c0_0, %c0_1] : memref<1x4x256xf32, #tpu.memory_space<vmem>>, vector<1x4x256xf32>
    %c0_2 = arith.constant 0 : index
    %c0_3 = arith.constant 0 : index
    %c0_4 = arith.constant 0 : index
    %1 = vector.load %arg3[%c0_2, %c0_3, %c0_4] : memref<1x4x1xf32, #tpu.memory_space<vmem>>, vector<1x4x1xf32>
    %cst = arith.constant dense<0.000000e+00> : vector<1x256xf32>
    %2 = vector.multi_reduction <add>, %0, %cst [1] : vector<1x4x256xf32> to vector<1x256xf32>
    %3 = vector.shape_cast %2 : vector<1x256xf32> to vector<1x1x256xf32>
    %4 = arith.mulf %0, %0 : vector<1x4x256xf32>
    %cst_5 = arith.constant dense<0.000000e+00> : vector<1x256xf32>
    %5 = vector.multi_reduction <add>, %4, %cst_5 [1] : vector<1x4x256xf32> to vector<1x256xf32>
    %6 = vector.shape_cast %5 : vector<1x256xf32> to vector<1x1x256xf32>
    %cst_6 = arith.constant 2.500000e-01 : f32
    %7 = vector.broadcast %cst_6 : f32 to vector<1x1x256xf32>
    %8 = arith.mulf %3, %7 : vector<1x1x256xf32>
    %cst_7 = arith.constant 2.500000e-01 : f32
    %9 = vector.broadcast %cst_7 : f32 to vector<1x1x256xf32>
    %10 = arith.mulf %6, %9 : vector<1x1x256xf32>
    %11 = arith.mulf %8, %8 : vector<1x1x256xf32>
    %12 = arith.subf %10, %11 : vector<1x1x256xf32>
    %cst_8 = arith.constant 0.000000e+00 : f32
    %13 = vector.broadcast %cst_8 : f32 to vector<1x1x256xf32>
    %14 = arith.maximumf %12, %13 : vector<1x1x256xf32>
    %15 = vector.broadcast %8 : vector<1x1x256xf32> to vector<1x4x256xf32>
    %16 = arith.subf %0, %15 : vector<1x4x256xf32>
    %cst_9 = arith.constant 9.99999974E-6 : f32
    %17 = vector.broadcast %cst_9 : f32 to vector<1x1x256xf32>
    %18 = arith.addf %14, %17 : vector<1x1x256xf32>
    %19 = math.rsqrt %18 : vector<1x1x256xf32>
    %20 = vector.broadcast %19 : vector<1x1x256xf32> to vector<1x4x256xf32>
    %21 = arith.mulf %16, %20 : vector<1x4x256xf32>
    %22 = vector.broadcast %1 : vector<1x4x1xf32> to vector<1x4x256xf32>
    %23 = arith.mulf %21, %22 : vector<1x4x256xf32>
    %c0_10 = arith.constant 0 : index
    %c0_11 = arith.constant 0 : index
    %c0_12 = arith.constant 0 : index
    %24 = vector.load %arg4[%c0_10, %c0_11, %c0_12] : memref<1x4x256xf32, #tpu.memory_space<vmem>>, vector<1x4x256xf32>
    tpu.vector_store %arg4[%c0_10, %c0_11, %c0_12], %23 {strides = array<i32>} : memref<1x4x256xf32, #tpu.memory_space<vmem>>, vector<1x4x256xf32>,
    return
  }
  func.func @transform_0(%arg0: i32, %arg1: i32) -> (i32, i32, i32) {
    %c0_i32 = arith.constant 0 : i32
    %c0_i32_0 = arith.constant 0 : i32
    return %arg0, %c0_i32, %arg1 : i32, i32, i32
  }
  func.func @transform_1(%arg0: i32, %arg1: i32) -> (i32, i32, i32) {
    %c0_i32 = arith.constant 0 : i32
    %c0_i32_0 = arith.constant 0 : i32
    %c0_i32_1 = arith.constant 0 : i32
    %c0_i32_2 = arith.constant 0 : i32
    return %c0_i32, %c0_i32_0, %c0_i32_1 : i32, i32, i32
  }
  func.func @transform_2(%arg0: i32, %arg1: i32) -> (i32, i32, i32) {
    %c0_i32 = arith.constant 0 : i32
    %c0_i32_0 = arith.constant 0 : i32
    return %arg0, %c0_i32, %arg1 : i32, i32, i32
  }
}

</mosaic_0001>

<llo_original>
// kernel: tpu_custom_call.1
$region0: #{tpu_custom_call.1}
  #allocation0 [shape = 'u32[]', space=smem, size = 0x4, offset = 0x4, fixed_abs, tag = 'smem constant byte address 0x4 - core index']
  #allocation1 [shape = 'u32[72,128]{1,0:T(1,128)}', space=vmem, size = 0x9000, scoped, tag = 'internal scratch']
  %s0 = inlined_call_operand.hbm [shape: f32[2,4,256], index: 0, kind: input, shape index: {}]
  %s1 = inlined_call_operand.vmem [shape: f32[1,4,1], index: 1, kind: input, shape index: {}]
  %s2 = inlined_call_operand.hbm [shape: f32[2,4,256], index: 2, kind: output, shape index: {}]
  %s3 = sld [smem:[#allocation0]]
  $region45: #{tpu_custom_call.1} parent=0
    _
  %s5 = ssub.s32 1, %s3
  %s6 = scalar_select 0, %s5, %s3
  $region1: #{tpu_custom_call.1} parent=0
    #allocation2 [shape = 'u8[8192]{0}', space=vmem, size = 0x2000, scoped, tag = 'input window, operand 0']
    #allocation3 [shape = 's32[2]{0}', space=sflag, size = 0x8, scoped, tag = 'scoped memory for tpu_custom_call.1']
    #allocation4 [shape = 's32[2]{0}', space=sflag, size = 0x8, scoped, tag = 'scoped memory for tpu_custom_call.1']
    #allocation5 [shape = 'u8[8192]{0}', space=vmem, size = 0x2000, scoped, tag = 'output window, operand 0']
    %7 = vsyncpa [#allocation3], 0
    %s8 = scalar_lea.sflag [#allocation3], 1
    %9 = vsyncpa %s8, 0
    %10 = vsyncpa [#allocation4], 0
    %s11 = scalar_lea.sflag [#allocation4], 1
    %12 = vsyncpa %s11, 0
    loop: start=0, step=1, limit=4
    $region2: #{tpu_custom_call.1} parent=1 // loop_pre_header
      _
    $region3: #{tpu_custom_call.1} parent=1 // loop_header
      %s14 = sphi 0, %s18
      %p15 = scmp.ge.s32.totalorder %s14, 4
      %s21 = sphi 0, %s33
      %s22 = sphi 0, %s29
      %s23 = sphi 0, %s21
      %s24 = sphi 0, %s22
      %s25 = sphi 0, %s23
      %s26 = sphi 0, %s24
      %s38 = sphi 0, %s40
      %s41 = sphi 0, %s38
      %s42 = sphi 0, %s41
      %s58 = sphi 0, %s42
      %s62 = sphi 0, %s62
      %s64 = sphi 0, %s62
      %s65 = sphi 0, %s64
      %s79 = sphi 0, %s65
      %s87 = sphi 0, %s89
      %s90 = sphi 0, %s87
      %s91 = sphi 0, %s90
      %s107 = sphi 0, %s91
    $region4: #{tpu_custom_call.1} parent=1 // loop_header_branch
      %17 = sbr.rel (%p15) target = $region8
    $region5: #{tpu_custom_call.1} parent=1 // loop_body
      %s19 = ssub.s32 %s14, 1
      %s20 = ssub.s32 %s14, 2
      %s27 = sadd.s32 1, %s22
      %p28 = scmp.ge.s32.totalorder %s27, 1
      %s29 = scalar_select %p28, 0, %s27
      %s30 = sadd.s32 1, %s21
      %s31 = scalar_select %p28, %s30, %s21
      %p32 = scmp.ge.s32.totalorder %s31, 2
      %s33 = scalar_select %p32, 0, %s31
      %s34 = ssub.s32 %s21, %s33
      %s35 = ssub.s32 %s22, %s29
      %s36 = sor.u32 %s34, %s35
      %p37 = scmp.eq.s32.totalorder %s36, 0
      %s39 = sadd.s32 %s38, 1
      %s40 = scalar_select %p37, %s38, %s39
      %p43 = pneg %p37
      %p44 = scmp.eq.s32.totalorder %s14, 1
      %p45 = por %p43, %p44
      %p46 = scmp.ne.s32.totalorder %s38, %s41
      %p47 = scmp.eq.s32.totalorder %s14, 0
      %p48 = por %p46, %p47
      %p49 = scmp.ne.s32.totalorder %s38, %s41
      %p50 = scmp.eq.s32.totalorder %s19, 1
      %p51 = por %p49, %p50
      %p52 = scmp.ne.s32.totalorder %s41, %s42
      %p53 = scmp.eq.s32.totalorder %s19, 0
      %p54 = por %p52, %p53
      %p55 = scmp.ne.s32.totalorder %s41, %s42
      %p56 = scmp.eq.s32.totalorder %s20, 1
      %p57 = por %p55, %p56
      %p59 = scmp.ne.s32.totalorder %s42, %s58
      %p60 = scmp.eq.s32.totalorder %s20, 0
      %p61 = por %p59, %p60
      %s63 = sadd.s32 %s62, 1
      %p66 = scmp.eq.s32.totalorder %s14, 1
      %p67 = scmp.ne.s32.totalorder %s62, %s64
      %p68 = scmp.eq.s32.totalorder %s14, 0
      %p69 = por %p67, %p68
      %p70 = scmp.ne.s32.totalorder %s62, %s64
      %p71 = scmp.eq.s32.totalorder %s19, 1
      %p72 = por %p70, %p71
      %p73 = scmp.ne.s32.totalorder %s64, %s65
      %p74 = scmp.eq.s32.totalorder %s19, 0
      %p75 = por %p73, %p74
      %p76 = scmp.ne.s32.totalorder %s64, %s65
      %p77 = scmp.eq.s32.totalorder %s20, 1
      %p78 = por %p76, %p77
      %p80 = scmp.ne.s32.totalorder %s65, %s79
      %p81 = scmp.eq.s32.totalorder %s20, 0
      %p82 = por %p80, %p81
      %s83 = ssub.s32 %s21, %s33
      %s84 = ssub.s32 %s22, %s29
      %s85 = sor.u32 %s83, %s84
      %p86 = scmp.eq.s32.totalorder %s85, 0
      %s88 = sadd.s32 %s87, 1
      %s89 = scalar_select %p86, %s87, %s88
      %p92 = pneg %p86
      %p93 = scmp.eq.s32.totalorder %s14, 1
      %p94 = por %p92, %p93
      %p95 = scmp.ne.s32.totalorder %s87, %s90
      %p96 = scmp.eq.s32.totalorder %s14, 0
      %p97 = por %p95, %p96
      %p98 = scmp.ne.s32.totalorder %s87, %s90
      %p99 = scmp.eq.s32.totalorder %s19, 1
      %p100 = por %p98, %p99
      %p101 = scmp.ne.s32.totalorder %s90, %s91
      %p102 = scmp.eq.s32.totalorder %s19, 0
      %p103 = por %p101, %p102
      %p104 = scmp.ne.s32.totalorder %s90, %s91
      %p105 = scmp.eq.s32.totalorder %s20, 1
      %p106 = por %p104, %p105
      %p108 = scmp.ne.s32.totalorder %s91, %s107
      %p109 = scmp.eq.s32.totalorder %s20, 0
      %p110 = por %p108, %p109
      %p111 = scmp.le.s32.totalorder 1, %s14
      %p112 = scmp.lt.s32.totalorder %s14, 3
      %p113 = pnand %p111, %p112
      %p114 = pneg %p113
      // Predicated region
      $region9: #{tpu_custom_call.1} parent=5 // pred_check
        _
      $region10: #{tpu_custom_call.1} parent=5 // pred_check_branch
        %116 = sbr.rel (%p113) target = $region12
      $region11: #{tpu_custom_call.1} parent=5 // pred_region
        %s117 = ssub.s32 %s14, 1
        // Predicated region
        $region13: #{tpu_custom_call.1} parent=11 // pred_check
          %p118 = pneg %p75
        $region14: #{tpu_custom_call.1} parent=11 // pred_check_branch
          %120 = sbr.rel (%p118) target = $region16
        $region15: #{tpu_custom_call.1} parent=11 // pred_region
          _
        $region16: #{tpu_custom_call.1} parent=11 // pred_fallthru
          _
      $region12: #{tpu_custom_call.1} parent=5 // pred_fallthru
        _
      %p121 = scmp.lt.s32.totalorder %s14, 2
      // Predicated region
      $region17: #{tpu_custom_call.1} parent=5 // pred_check
        %p122 = pneg %p121
      $region18: #{tpu_custom_call.1} parent=5 // pred_check_branch
        %124 = sbr.rel (%p122) target = $region20
      $region19: #{tpu_custom_call.1} parent=5 // pred_region
        // Predicated region
        $region21: #{tpu_custom_call.1} parent=19 // pred_check
          %p125 = pneg %p48
        $region22: #{tpu_custom_call.1} parent=19 // pred_check_branch
          %127 = sbr.rel (%p125) target = $region24
        $region23: #{tpu_custom_call.1} parent=19 // pred_region
          %s128 = sand.u32 %s38, 1
          %s129 = scalar_lea.sflag [#allocation3], %s128
          %s130 = sand.u32 %s38, 1
          %s131 = smul.addr %s130, 8
          %s132 = scalar_lea.vmem [#allocation2], %s131
          %s133 = smul.u32 2, %s22
          %135 = vsyncadd %s129, 0
          %s136 = smul.addr %s21, 2
          %s137 = sadd.s32 %s133, %s136
          %s138 = smul.addr %s137, 4
          %s139 = scalar_lea.hbm %s0, %s138
          %s141 = sshll.u32 %s139, 4
          %s142 = int_to_ptr.hbm [resolvable:$true] %s141
          %s143 = sshll.u32 %s132, 4
          %s144 = int_to_ptr.vmem [resolvable:$true] %s143
          %146 = dma.hbm_to_vmem [thread:$0]  %s142, 128, %s144, %s129
        $region24: #{tpu_custom_call.1} parent=19 // pred_fallthru
          _
      $region20: #{tpu_custom_call.1} parent=5 // pred_fallthru
        _
      %p147 = scmp.le.s32.totalorder 1, %s14
      %p148 = scmp.lt.s32.totalorder %s14, 3
      %p149 = pnand %p147, %p148
      %p150 = pneg %p149
      // Predicated region
      $region25: #{tpu_custom_call.1} parent=5 // pred_check
        _
      $region26: #{tpu_custom_call.1} parent=5 // pred_check_branch
        %152 = sbr.rel (%p149) target = $region28
      $region27: #{tpu_custom_call.1} parent=5 // pred_region
        %s153 = ssub.s32 %s14, 1
        %s154 = sand.u32 %s41, 1
        %s155 = scalar_lea.sflag [#allocation3], %s154
        %s156 = sand.u32 %s41, 1
        %s157 = smul.addr %s156, 8
        %s158 = scalar_lea.vmem [#allocation2], %s157
        // Predicated region
        $region29: #{tpu_custom_call.1} parent=27 // pred_check
          %p159 = pneg %p54
        $region30: #{tpu_custom_call.1} parent=27 // pred_check_branch
          %161 = sbr.rel (%p159) target = $region32
        $region31: #{tpu_custom_call.1} parent=27 // pred_region
          %163 = dma.done %s155, 128
        $region32: #{tpu_custom_call.1} parent=27 // pred_fallthru
          _
        %s164 = sand.u32 %s41, 1
        %s165 = scalar_lea.sflag [#allocation3], %s164
        %s166 = sand.u32 %s41, 1
        %s167 = smul.addr %s166, 8
        %s168 = scalar_lea.vmem [#allocation2], %s167
        %p169 = pneg %p54
        %p170 = pneg %p51
        %p171 = pneg %p75
        %p172 = pneg %p72
        %p173 = pneg %p103
        %p174 = pneg %p100
        %s175 = sand.u32 %s90, 1
        %s176 = scalar_lea.sflag [#allocation4], %s175
        %s177 = sand.u32 %s90, 1
        %s178 = smul.addr %s177, 8
        %s179 = scalar_lea.vmem [#allocation5], %s178
        %s180 = smul.u32 2, %s24
        %s181 = smul.u32 2, %s24
        %v182 = vld [vmem:[%s158] sm:$0xff]
        %v183 = vld [vmem:[%s1] sm:$0xf]
        %185 = vst [vmem:[#allocation1] ss:$2 sm:$0xff] %v182
        %v186 = vld.sshfl [vmem:[#allocation1] sm:$0xff pattern:$0x75316420]
        %v187 = vld.sshfl [vmem:[#allocation1 + $0x8] sm:$0xff pattern:$0x75316420]
        %vm190 = vcmask 1043456
        %v191 = vsel %vm190, %v186, 0.0
        %v192 = vrot.slane %v191, 4
        %v193 = vadd.f32 %v191, %v192
        %v194 = vrot.slane %v193, 2
        %v195 = vadd.f32 %v193, %v194
        %v196 = vrot.slane %v195, 1
        %v197 = vadd.f32 %v195, %v196
        %v198 = vsel %vm190, %v187, 0.0
        %v199 = vrot.slane %v198, 4
        %v200 = vadd.f32 %v198, %v199
        %v201 = vrot.slane %v200, 2
        %v202 = vadd.f32 %v200, %v201
        %v203 = vrot.slane %v202, 1
        %v204 = vadd.f32 %v202, %v203
        %v205 = vmul.f32 %v182, %v182
        %207 = vst [vmem:[#allocation1] ss:$2 sm:$0xff] %v205
        %v208 = vld.sshfl [vmem:[#allocation1] sm:$0xff pattern:$0x75316420]
        %v209 = vld.sshfl [vmem:[#allocation1 + $0x8] sm:$0xff pattern:$0x75316420]
        %v212 = vsel %vm190, %v208, 0.0
        %v213 = vrot.slane %v212, 4
        %v214 = vadd.f32 %v212, %v213
        %v215 = vrot.slane %v214, 2
        %v216 = vadd.f32 %v214, %v215
        %v217 = vrot.slane %v216, 1
        %v218 = vadd.f32 %v216, %v217
        %v219 = vsel %vm190, %v209, 0.0
        %v220 = vrot.slane %v219, 4
        %v221 = vadd.f32 %v219, %v220
        %v222 = vrot.slane %v221, 2
        %v223 = vadd.f32 %v221, %v222
        %v224 = vrot.slane %v223, 1
        %v225 = vadd.f32 %v223, %v224
        %v226 = vmul.f32 %v197, 0.25
        %v227 = vmul.f32 %v204, 0.25
        %v228 = vmul.f32 %v218, 0.25
        %v229 = vmul.f32 %v225, 0.25
        %v230 = vmul.f32 %v226, %v226
        %v231 = vmul.f32 %v227, %v227
        %v232 = vsub.f32 %v228, %v230
        %v233 = vsub.f32 %v229, %v231
        %v234 = vmax.f32 %v232, 0.0
        %v235 = vmax.f32 %v233, 0.0
        %v238 = vrot.slane %v227, 4
        %v239 = vsel %vm190, %v226, %v238
        %v241 = vsub.f32 %v182, %v239
        %v242 = vadd.f32 %v234, 1e-05
        %v243 = vadd.f32 %v235, 1e-05
        %v244 = vrsqrt.pop %v242
        %v245 = vmul.f32 %v244, %v242
        %v246 = vmul.f32 %v245, %v244
        %v247 = vmul.f32 0.5, %v246
        %v248 = vsub.f32 1.5, %v247
        %v249 = vmul.f32 %v244, %v248
        %vm250 = vweird.f32 %v242
        %vm251 = vweird.f32 %v244
        %vm252 = vmor %vm250, %vm251
        %v253 = vsel %vm252, %v244, %v249
        %v254 = vrsqrt.pop %v243
        %v255 = vmul.f32 %v254, %v243
        %v256 = vmul.f32 %v255, %v254
        %v257 = vmul.f32 0.5, %v256
        %v258 = vsub.f32 1.5, %v257
        %v259 = vmul.f32 %v254, %v258
        %vm260 = vweird.f32 %v243
        %vm261 = vweird.f32 %v254
        %vm262 = vmor %vm260, %vm261
        %v263 = vsel %vm262, %v254, %v259
        %v266 = vrot.slane %v263, 4
        %v267 = vsel %vm190, %v253, %v266
        %v269 = vmul.f32 %v241, %v267
        %271 = vset.pattern.permute.xlu0 0
        %272 = vperm.xlu0 %271, %v183
        %v273 = vpop.permute.xlu0 %272
        %v275 = vunpack.c.l.s4 839922192
        %v276 = vunpack.c.0.s8 %v275
        %v277 = vperm.slane %v273, %v276
        %v279 = vmul.f32 %v269, %v277
        %280 = vst [vmem:[%s179] sm:$0xff] %v279
        %s281 = sand.u32 %s90, 1
        %s282 = scalar_lea.sflag [#allocation4], %s281
        %s283 = sand.u32 %s90, 1
        %s284 = smul.addr %s283, 8
        %s285 = scalar_lea.vmem [#allocation5], %s284
        // Predicated region
        $region33: #{tpu_custom_call.1} parent=27 // pred_check
          %p286 = pneg %p100
        $region34: #{tpu_custom_call.1} parent=27 // pred_check_branch
          %288 = sbr.rel (%p286) target = $region36
        $region35: #{tpu_custom_call.1} parent=27 // pred_region
          %s289 = smul.u32 2, %s24
          %291 = vsyncadd %s282, 0
          %s292 = smul.addr %s23, 2
          %s293 = sadd.s32 %s289, %s292
          %s294 = smul.addr %s293, 4
          %s295 = scalar_lea.hbm %s2, %s294
          %s297 = sshll.u32 %s285, 4
          %s298 = int_to_ptr.vmem [resolvable:$true] %s297
          %s299 = sshll.u32 %s295, 4
          %s300 = int_to_ptr.hbm [resolvable:$true] %s299
          %302 = dma.vmem_to_hbm [thread:$0]  %s298, 128, %s300, %s282
        $region36: #{tpu_custom_call.1} parent=27 // pred_fallthru
          _
      $region28: #{tpu_custom_call.1} parent=5 // pred_fallthru
        _
      %p303 = scmp.le.s32.totalorder 2, %s14
      // Predicated region
      $region37: #{tpu_custom_call.1} parent=5 // pred_check
        %p304 = pneg %p303
      $region38: #{tpu_custom_call.1} parent=5 // pred_check_branch
        %306 = sbr.rel (%p304) target = $region40
      $region39: #{tpu_custom_call.1} parent=5 // pred_region
        %s307 = ssub.s32 %s14, 2
        // Predicated region
        $region41: #{tpu_custom_call.1} parent=39 // pred_check
          %p308 = pneg %p106
        $region42: #{tpu_custom_call.1} parent=39 // pred_check_branch
          %310 = sbr.rel (%p308) target = $region44
        $region43: #{tpu_custom_call.1} parent=39 // pred_region
          %s311 = sand.u32 %s91, 1
          %s312 = scalar_lea.sflag [#allocation4], %s311
          %s313 = sand.u32 %s91, 1
          %s314 = smul.addr %s313, 8
          %s315 = scalar_lea.vmem [#allocation5], %s314
          %317 = dma.done %s312, 128
        $region44: #{tpu_custom_call.1} parent=39 // pred_fallthru
          _
      $region40: #{tpu_custom_call.1} parent=5 // pred_fallthru
        _
    $region6: #{tpu_custom_call.1} parent=1 // loop_footer
      %s18 = sadd.s32 1, %s14
    $region7: #{tpu_custom_call.1} parent=1 // loop_footer_branch
      %13 = sbr.rel target = $region3
    $region8: #{tpu_custom_call.1} parent=1 // loop_exit
      _
    %318 = vsyncpa [#allocation3], 1
    %s319 = scalar_lea.sflag [#allocation3], 1
    %320 = vsyncpa %s319, 1
    %321 = vsyncpa [#allocation4], 1
    %s322 = scalar_lea.sflag [#allocation4], 1
    %323 = vsyncpa %s322, 1

</llo_original>
